<compile_context>
chip_gen: v6e
topology: v6e:2x2x1
jax: 0.10.0
libtpu: 0.0.40
codegen_flags: <defaults>
</compile_context>

<pallas_src>
import functools

import jax
import jax.numpy as jnp
from jax.experimental import pallas as pl
from jax.experimental.pallas import tpu as pltpu

LANE = 128     # vreg lane width (fast axis)
SUBLANE = 8    # f32 sublane granularity


def _round_up(x, m):
    return (x + m - 1) // m * m


def _pick_hidden_tile(hid_p, in_p, bytes_per_el, budget=16 << 20):
    """Largest multiple-of-128 divisor of hid_p whose w1/w2 tiles fit `budget`."""
    m = hid_p // LANE
    best = LANE
    for d in range(1, m + 1):
        if m % d != 0:
            continue
        tk = d * LANE
        if (in_p * tk + tk * hid_p) * bytes_per_el <= budget:
            best = tk
    return best


# -----------------------------------------------------------------------------
# Kernel: fused 3-layer MLP, grid = (batch tiles, hidden-K tiles).
# -----------------------------------------------------------------------------
def mlp_kernel(x_ref, w1_ref, b1_ref, w2_ref, b2_ref, w3_ref, b3_ref,
               o_ref, acc_ref):
    k = pl.program_id(1)
    n_k = pl.num_programs(1)

    # ---- layer 1 (N-tiled over hidden): h1_k = relu(x @ w1[:, k] + b1[k]) ----
    # MXU accumulates in f32; bias-add / ReLU stay f32 on the VPU (v5e has no
    # bf16 VPU path).
    h1 = jnp.dot(x_ref[...], w1_ref[...],
                 preferred_element_type=jnp.float32) + b1_ref[...]
    h1 = jnp.maximum(h1, 0.0).astype(w2_ref.dtype)

    # ---- layer 2 (K-tiled over hidden): acc += h1_k @ w2[k, :] --------------
    @pl.when(k == 0)
    def _():
        acc_ref[...] = jnp.zeros_like(acc_ref)

    acc_ref[...] += jnp.dot(h1, w2_ref[...], preferred_element_type=jnp.float32)

    # ---- finalize on the last K step: bias + ReLU, then layer 3 -------------
    @pl.when(k == n_k - 1)
    def _():
        h2 = jnp.maximum(acc_ref[...] + b2_ref[...], 0.0).astype(w3_ref.dtype)
        out = jnp.dot(h2, w3_ref[...],
                      preferred_element_type=jnp.float32) + b3_ref[...]
        o_ref[...] = out.astype(o_ref.dtype)


# -----------------------------------------------------------------------------
# One-time parameter preparation (hoisted out of the per-call forward).
# -----------------------------------------------------------------------------
def prepare_params(params, compute_dtype=jnp.bfloat16):
    """Zero-pad feature dims to 128-lane multiples and cast weights once.

    Weights are cast to `compute_dtype` (MXU input dtype); biases stay f32
    because bias-add happens on the f32 accumulation.
    """
    # TODO(synk): optional fp8 weight path for the v7x MXU (gate on accuracy).
    in_size, hidden = params["w1"].shape
    num_classes = params["w3"].shape[1]
    in_p = _round_up(in_size, LANE)
    hid_p = _round_up(hidden, LANE)
    out_p = _round_up(num_classes, LANE)

    def pad_w(w, rows, cols):
        return (jnp.zeros((rows, cols), compute_dtype)
                .at[: w.shape[0], : w.shape[1]].set(w.astype(compute_dtype)))

    def pad_b(b, cols):
        b = jnp.reshape(b, (1, -1))
        return (jnp.zeros((1, cols), jnp.float32)
                .at[:, : b.shape[1]].set(b.astype(jnp.float32)))

    return dict(
        w1=pad_w(params["w1"], in_p, hid_p), b1=pad_b(params["b1"], hid_p),
        w2=pad_w(params["w2"], hid_p, hid_p), b2=pad_b(params["b2"], hid_p),
        w3=pad_w(params["w3"], hid_p, out_p), b3=pad_b(params["b3"], out_p),
    )


# -----------------------------------------------------------------------------
# Forward pass.
# -----------------------------------------------------------------------------
@functools.partial(jax.jit,
                   static_argnames=("num_classes", "batch_tile", "hidden_tile"))
def neural_net_forward(x, padded_params, *, num_classes,
                       batch_tile=None, hidden_tile=None):
    """Forward pass of NeuralNet.

    x: (B, input_size).
    padded_params: output of prepare_params (padded + cast once, reused).
    num_classes: logical (unpadded) number of output classes (static).
    """
    pp = padded_params
    compute_dtype = pp["w1"].dtype
    in_p, hid_p = pp["w1"].shape
    out_p = pp["w3"].shape[1]
    B, in_size = x.shape
    bpe = jnp.dtype(compute_dtype).itemsize

    # ---- batch-tile selection ------------------------------------------------
    if batch_tile is None:
        # Small problems: a single grid step (the grid is a sequential loop on
        # one TensorCore; ~0.35us/step overhead dwarfs a tiny MLP).  Large
        # batches: 256-row tiles fill the MXU M dim, amortize per-step overhead
        # and let the "parallel" axis shard tiles across v7x's two TCs.
        # TODO(synk): on v7x specifically, prefer an even >=2-step batch grid
        # even for small B so both TensorCores get work.
        tb = _round_up(B, SUBLANE) if B <= 512 else 256
    else:
        tb = _round_up(int(batch_tile), SUBLANE)
    b_p = _round_up(B, tb)
    n_b = b_p // tb

    # ---- hidden (K) tile selection --------------------------------------------
    if hidden_tile is None:
        tk = _pick_hidden_tile(hid_p, in_p, bpe)
    else:
        tk = _round_up(int(hidden_tile), LANE)
    assert hid_p % tk == 0, "hidden_tile must be a multiple-of-128 divisor of padded hidden"
    n_k = hid_p // tk

    # ---- conditional x padding / casting (skip when already aligned) ---------
    if b_p != B or in_p != in_size:
        x_in = (jnp.zeros((b_p, in_p), compute_dtype)
                .at[:B, :in_size].set(x.astype(compute_dtype)))
    else:
        x_in = x.astype(compute_dtype)

    # ---- buffering: invariant operands get a single VMEM copy ----------------
    single = pl.Buffered(1)                     # DMA'd once, one resident copy
    w12_mode = single if n_k == 1 else None     # streamed over K -> keep double buffer

    # ---- explicit scoped-VMEM budget ------------------------------------------
    w12_bufs = 1 if n_k == 1 else 2
    est = (
        (in_p * tk + tk * hid_p) * bpe * w12_bufs       # w1 / w2 tiles
        + hid_p * out_p * bpe                            # w3 (resident, 1 buffer)
        + (tk * w12_bufs + hid_p + out_p) * 4            # f32 biases
        + 2 * tb * in_p * bpe                            # x tile (double-buffered)
        + 2 * tb * out_p * 4                             # out tile (double-buffered)
        + tb * hid_p * 4                                 # f32 accumulator scratch
        + 3 * tb * max(in_p, hid_p, out_p) * 4           # h1/h2/compiler temporaries
    )
    vmem_limit = int(min(max(est * 3 // 2 + (4 << 20), 32 << 20), 128 << 20))

    out_padded = pl.pallas_call(
        mlp_kernel,
        out_shape=jax.ShapeDtypeStruct((b_p, out_p), jnp.float32),
        grid_spec=pltpu.PrefetchScalarGridSpec(
            num_scalar_prefetch=0,
            grid=(n_b, n_k),
            in_specs=[
                # x tile: streamed over batch, resident across the K axis.
                pl.BlockSpec((tb, in_p), lambda i, k: (i, 0)),
                # w1 columns / b1 lanes for this K tile.
                pl.BlockSpec((in_p, tk), lambda i, k: (0, k), pipeline_mode=w12_mode),
                pl.BlockSpec((1, tk), lambda i, k: (0, k), pipeline_mode=w12_mode),
                # w2 rows for this K tile.
                pl.BlockSpec((tk, hid_p), lambda i, k: (k, 0), pipeline_mode=w12_mode),
                # Invariant operands: one VMEM copy each, DMA'd once.
                pl.BlockSpec((1, hid_p), lambda i, k: (0, 0), pipeline_mode=single),
                pl.BlockSpec((hid_p, out_p), lambda i, k: (0, 0), pipeline_mode=single),
                pl.BlockSpec((1, out_p), lambda i, k: (0, 0), pipeline_mode=single),
            ],
            out_specs=pl.BlockSpec((tb, out_p), lambda i, k: (i, 0)),
            scratch_shapes=[pltpu.VMEM((tb, hid_p), jnp.float32)],
        ),
        compiler_params=pltpu.CompilerParams(
            dimension_semantics=("parallel", "arbitrary"),
            vmem_limit_bytes=vmem_limit,
        ),
    )(x_in, pp["w1"], pp["b1"], pp["w2"], pp["b2"], pp["w3"], pp["b3"])

    if b_p != B or out_p != num_classes:
        return out_padded[:B, :num_classes]
    return out_padded


# -----------------------------------------------------------------------------
# Init / reference (pure JAX) for verification.
# -----------------------------------------------------------------------------
def init_params(key, input_size, hidden_size, num_classes):
    """Deterministic init mimicking nn.Linear's U(-1/sqrt(fan_in), 1/sqrt(fan_in))."""
    ks = jax.random.split(key, 6)

    def linear(kw, kb, fan_in, fan_out):
        bound = 1.0 / jnp.sqrt(fan_in)
        w = jax.random.uniform(kw, (fan_in, fan_out), jnp.float32, -bound, bound)
        b = jax.random.uniform(kb, (1, fan_out), jnp.float32, -bound, bound)
        return w, b

    w1, b1 = linear(ks[0], ks[1], input_size, hidden_size)
    w2, b2 = linear(ks[2], ks[3], hidden_size, hidden_size)
    w3, b3 = linear(ks[4], ks[5], hidden_size, num_classes)
    return dict(w1=w1, b1=b1, w2=w2, b2=b2, w3=w3, b3=b3)


def reference_forward(x, p):
    h1 = jnp.maximum(x @ p["w1"] + p["b1"], 0.0)
    h2 = jnp.maximum(h1 @ p["w2"] + p["b2"], 0.0)
    return h2 @ p["w3"] + p["b3"]


if __name__ == "__main__":
    key = jax.random.PRNGKey(0)
    k_x, k_p = jax.random.split(key)

    # Small shapes consistent with the module.
    batch, input_size, hidden_size, num_classes = 64, 32, 32, 8
    x = jax.random.normal(k_x, (batch, input_size), jnp.float32)
    params = init_params(k_p, input_size, hidden_size, num_classes)

    ref = reference_forward(x, params)

    # bf16 MXU path (default): params padded/cast ONCE, reused per call.
    pp_bf16 = jax.tree.map(jax.block_until_ready,
                           prepare_params(params, jnp.bfloat16))
    out_bf16 = jax.block_until_ready(
        neural_net_forward(x, pp_bf16, num_classes=num_classes)
    )
    assert out_bf16.shape == (batch, num_classes)
    assert jnp.allclose(out_bf16, ref, atol=3e-2, rtol=3e-2), \
        "bf16 mismatch vs JAX reference"

    # f32 path (exact-ish check of the kernel structure).
    pp_f32 = jax.tree.map(jax.block_until_ready,
                          prepare_params(params, jnp.float32))
    out_f32 = jax.block_until_ready(
        neural_net_forward(x, pp_f32, num_classes=num_classes)
    )
    assert out_f32.shape == (batch, num_classes)
    assert jnp.allclose(out_f32, ref, atol=1e-5, rtol=1e-5), \
        "f32 mismatch vs JAX reference"

    print("KERNEL_OK")
</pallas_src>

<mosaic_0001>
module attributes {stable_mosaic.version = 11 : i64} {
  func.func @mlp_kernel(%arg0: i32, %arg1: i32, %arg2: memref<64x128xbf16, #tpu.memory_space<vmem>>, %arg3: memref<128x128xbf16, #tpu.memory_space<vmem>>, %arg4: memref<1x128xf32, #tpu.memory_space<vmem>>, %arg5: memref<128x128xbf16, #tpu.memory_space<vmem>>, %arg6: memref<1x128xf32, #tpu.memory_space<vmem>>, %arg7: memref<128x128xbf16, #tpu.memory_space<vmem>>, %arg8: memref<1x128xf32, #tpu.memory_space<vmem>>, %arg9: memref<64x128xf32, #tpu.memory_space<vmem>>, %arg10: memref<64x128xf32, #tpu.memory_space<vmem>>) attributes {dimension_semantics = [#tpu.dimension_semantics<parallel>, #tpu.dimension_semantics<arbitrary>], iteration_bounds = array<i64: 1, 1>, scalar_prefetch = 0 : i64, scratch_operands = 1 : i64, tpu.core_type = #tpu.core_type<tc>, window_params = [{transform_indices = @transform_0, window_bounds = array<i64: 64, 128>}, {pipeline_mode = #tpu.pipeline_mode<synchronous>, transform_indices = @transform_1, window_bounds = array<i64: 128, 128>}, {pipeline_mode = #tpu.pipeline_mode<synchronous>, transform_indices = @transform_2, window_bounds = array<i64: 1, 128>}, {pipeline_mode = #tpu.pipeline_mode<synchronous>, transform_indices = @transform_3, window_bounds = array<i64: 128, 128>}, {pipeline_mode = #tpu.pipeline_mode<synchronous>, transform_indices = @transform_4, window_bounds = array<i64: 1, 128>}, {pipeline_mode = #tpu.pipeline_mode<synchronous>, transform_indices = @transform_5, window_bounds = array<i64: 128, 128>}, {pipeline_mode = #tpu.pipeline_mode<synchronous>, transform_indices = @transform_6, window_bounds = array<i64: 1, 128>}, {transform_indices = @transform_7, window_bounds = array<i64: 64, 128>}]} {
    %c0 = arith.constant 0 : index
    %c0_0 = arith.constant 0 : index
    %0 = vector.load %arg2[%c0, %c0_0] : memref<64x128xbf16, #tpu.memory_space<vmem>>, vector<64x128xbf16>
    %c0_1 = arith.constant 0 : index
    %c0_2 = arith.constant 0 : index
    %1 = vector.load %arg3[%c0_1, %c0_2] : memref<128x128xbf16, #tpu.memory_space<vmem>>, vector<128x128xbf16>
    %cst = arith.constant dense<0.000000e+00> : vector<64x128xf32>
    %2 = tpu.matmul %0, %1, %cst {dimension_numbers = #tpu.dot_dimension_numbers<[1], [0], [0], [1], [0, 0, 1, 1], [], []>} : vector<64x128xbf16>, vector<128x128xbf16>, vector<64x128xf32> -> vector<64x128xf32>
    %c0_3 = arith.constant 0 : index
    %c0_4 = arith.constant 0 : index
    %3 = vector.load %arg4[%c0_3, %c0_4] : memref<1x128xf32, #tpu.memory_space<vmem>>, vector<1x128xf32>
    %4 = vector.broadcast %3 : vector<1x128xf32> to vector<64x128xf32>
    %5 = arith.addf %2, %4 : vector<64x128xf32>
    %cst_5 = arith.constant 0.000000e+00 : f32
    %6 = vector.broadcast %cst_5 : f32 to vector<64x128xf32>
    %7 = arith.maximumf %5, %6 : vector<64x128xf32>
    %8 = arith.truncf %7 : vector<64x128xf32> to vector<64x128xbf16>
    %c0_i32 = arith.constant 0 : i32
    %9 = arith.cmpi eq, %arg1, %c0_i32 : i32
    %10 = arith.extui %9 : i1 to i32
    %c0_i32_6 = arith.constant 0 : i32
    %11 = arith.cmpi ne, %10, %c0_i32_6 : i32
    scf.if %11 {
      %cst_16 = arith.constant 0.000000e+00 : f32
      %20 = vector.broadcast %cst_16 : f32 to vector<64x128xf32>
      %c0_17 = arith.constant 0 : index
      %c0_18 = arith.constant 0 : index
      %21 = vector.load %arg10[%c0_17, %c0_18] : memref<64x128xf32, #tpu.memory_space<vmem>>, vector<64x128xf32>
      tpu.vector_store %arg10[%c0_17, %c0_18], %20 {strides = array<i32>} : memref<64x128xf32, #tpu.memory_space<vmem>>, vector<64x128xf32>,
    } else {
    }
    %c0_7 = arith.constant 0 : index
    %c0_8 = arith.constant 0 : index
    %12 = vector.load %arg10[%c0_7, %c0_8] : memref<64x128xf32, #tpu.memory_space<vmem>>, vector<64x128xf32>
    %c0_9 = arith.constant 0 : index
    %c0_10 = arith.constant 0 : index
    %13 = vector.load %arg5[%c0_9, %c0_10] : memref<128x128xbf16, #tpu.memory_space<vmem>>, vector<128x128xbf16>
    %cst_11 = arith.constant dense<0.000000e+00> : vector<64x128xf32>
    %14 = tpu.matmul %8, %13, %cst_11 {dimension_numbers = #tpu.dot_dimension_numbers<[1], [0], [0], [1], [0, 0, 1, 1], [], []>} : vector<64x128xbf16>, vector<128x128xbf16>, vector<64x128xf32> -> vector<64x128xf32>
    %15 = arith.addf %12, %14 : vector<64x128xf32>
    %c0_12 = arith.constant 0 : index
    %c0_13 = arith.constant 0 : index
    %16 = vector.load %arg10[%c0_12, %c0_13] : memref<64x128xf32, #tpu.memory_space<vmem>>, vector<64x128xf32>
    tpu.vector_store %arg10[%c0_12, %c0_13], %15 {strides = array<i32>} : memref<64x128xf32, #tpu.memory_space<vmem>>, vector<64x128xf32>,
    %c0_i32_14 = arith.constant 0 : i32
    %17 = arith.cmpi eq, %arg1, %c0_i32_14 : i32
    %18 = arith.extui %17 : i1 to i32
    %c0_i32_15 = arith.constant 0 : i32
    %19 = arith.cmpi ne, %18, %c0_i32_15 : i32
    scf.if %19 {
      %c0_16 = arith.constant 0 : index
      %c0_17 = arith.constant 0 : index
      %20 = vector.load %arg10[%c0_16, %c0_17] : memref<64x128xf32, #tpu.memory_space<vmem>>, vector<64x128xf32>
      %c0_18 = arith.constant 0 : index
      %c0_19 = arith.constant 0 : index
      %21 = vector.load %arg6[%c0_18, %c0_19] : memref<1x128xf32, #tpu.memory_space<vmem>>, vector<1x128xf32>
      %22 = vector.broadcast %21 : vector<1x128xf32> to vector<64x128xf32>
      %23 = arith.addf %20, %22 : vector<64x128xf32>
      %cst_20 = arith.constant 0.000000e+00 : f32
      %24 = vector.broadcast %cst_20 : f32 to vector<64x128xf32>
      %25 = arith.maximumf %23, %24 : vector<64x128xf32>
      %26 = arith.truncf %25 : vector<64x128xf32> to vector<64x128xbf16>
      %c0_21 = arith.constant 0 : index
      %c0_22 = arith.constant 0 : index
      %27 = vector.load %arg7[%c0_21, %c0_22] : memref<128x128xbf16, #tpu.memory_space<vmem>>, vector<128x128xbf16>
      %cst_23 = arith.constant dense<0.000000e+00> : vector<64x128xf32>
      %28 = tpu.matmul %26, %27, %cst_23 {dimension_numbers = #tpu.dot_dimension_numbers<[1], [0], [0], [1], [0, 0, 1, 1], [], []>} : vector<64x128xbf16>, vector<128x128xbf16>, vector<64x128xf32> -> vector<64x128xf32>
      %c0_24 = arith.constant 0 : index
      %c0_25 = arith.constant 0 : index
      %29 = vector.load %arg8[%c0_24, %c0_25] : memref<1x128xf32, #tpu.memory_space<vmem>>, vector<1x128xf32>
      %30 = vector.broadcast %29 : vector<1x128xf32> to vector<64x128xf32>
      %31 = arith.addf %28, %30 : vector<64x128xf32>
      %c0_26 = arith.constant 0 : index
      %c0_27 = arith.constant 0 : index
      %32 = vector.load %arg9[%c0_26, %c0_27] : memref<64x128xf32, #tpu.memory_space<vmem>>, vector<64x128xf32>
      tpu.vector_store %arg9[%c0_26, %c0_27], %31 {strides = array<i32>} : memref<64x128xf32, #tpu.memory_space<vmem>>, vector<64x128xf32>,
    } else {
    }
    return
  }
  func.func @transform_0(%arg0: i32, %arg1: i32) -> (i32, i32) {
    %c0_i32 = arith.constant 0 : i32
    %c0_i32_0 = arith.constant 0 : i32
    return %arg0, %c0_i32 : i32, i32
  }
  func.func @transform_1(%arg0: i32, %arg1: i32) -> (i32, i32) {
    %c0_i32 = arith.constant 0 : i32
    %c0_i32_0 = arith.constant 0 : i32
    return %c0_i32, %arg1 : i32, i32
  }
  func.func @transform_2(%arg0: i32, %arg1: i32) -> (i32, i32) {
    %c0_i32 = arith.constant 0 : i32
    %c0_i32_0 = arith.constant 0 : i32
    return %c0_i32, %arg1 : i32, i32
  }
  func.func @transform_3(%arg0: i32, %arg1: i32) -> (i32, i32) {
    %c0_i32 = arith.constant 0 : i32
    %c0_i32_0 = arith.constant 0 : i32
    return %arg1, %c0_i32 : i32, i32
  }
  func.func @transform_4(%arg0: i32, %arg1: i32) -> (i32, i32) {
    %c0_i32 = arith.constant 0 : i32
    %c0_i32_0 = arith.constant 0 : i32
    %c0_i32_1 = arith.constant 0 : i32
    return %c0_i32, %c0_i32_0 : i32, i32
  }
  func.func @transform_5(%arg0: i32, %arg1: i32) -> (i32, i32) {
    %c0_i32 = arith.constant 0 : i32
    %c0_i32_0 = arith.constant 0 : i32
    %c0_i32_1 = arith.constant 0 : i32
    return %c0_i32, %c0_i32_0 : i32, i32
  }
  func.func @transform_6(%arg0: i32, %arg1: i32) -> (i32, i32) {
    %c0_i32 = arith.constant 0 : i32
    %c0_i32_0 = arith.constant 0 : i32
    %c0_i32_1 = arith.constant 0 : i32
    return %c0_i32, %c0_i32_0 : i32, i32
  }
  func.func @transform_7(%arg0: i32, %arg1: i32) -> (i32, i32) {
    %c0_i32 = arith.constant 0 : i32
    %c0_i32_0 = arith.constant 0 : i32
    return %arg0, %c0_i32 : i32, i32
  }
}

</mosaic_0001>

<llo_original>
// kernel: neural_net_forward.1
$region0: #{neural_net_forward.1}
  #allocation0 [shape = 'u32[]', space=smem, size = 0x4, offset = 0x4, fixed_abs, tag = 'smem constant byte address 0x4 - core index']
  #allocation1 [shape = 'u32[144,128]{1,0:T(1,128)}', space=vmem, size = 0x12000, scoped, tag = 'internal scratch']
  #allocation2 [shape = 'f32[64,128]{1,0:T(8,128)}', space=vmem, size = 0x8000, scoped, tag = 'scratch operand']
  %s0 = inlined_call_operand.vmem [shape: bf16[64,128], index: 0, kind: input, shape index: {}]
  %s1 = inlined_call_operand.vmem [shape: bf16[128,128], index: 1, kind: input, shape index: {}]
  %s2 = inlined_call_operand.vmem [shape: f32[1,128], index: 2, kind: input, shape index: {}]
  %s3 = inlined_call_operand.vmem [shape: bf16[128,128], index: 3, kind: input, shape index: {}]
  %s4 = inlined_call_operand.vmem [shape: f32[1,128], index: 4, kind: input, shape index: {}]
  %s5 = inlined_call_operand.vmem [shape: bf16[128,128], index: 5, kind: input, shape index: {}]
  %s6 = inlined_call_operand.vmem [shape: f32[1,128], index: 6, kind: input, shape index: {}]
  %s7 = inlined_call_operand.vmem [shape: f32[64,128], index: 7, kind: output, shape index: {}]
  %s8 = sld [smem:[#allocation0]]
  $region46: #{neural_net_forward.1} parent=0
    _
  %s10 = ssub.s32 1, %s8
  %s11 = scalar_select 0, %s10, %s8
  // Predicated region
  $region2: #{neural_net_forward.1} parent=0 // pred_check
    _
  $region3: #{neural_net_forward.1} parent=0 // pred_check_branch
    %13 = sbr.rel (0) target = $region5
  $region4: #{neural_net_forward.1} parent=0 // pred_region
    _
  $region5: #{neural_net_forward.1} parent=0 // pred_fallthru
    _
  // Predicated region
  $region6: #{neural_net_forward.1} parent=0 // pred_check
    _
  $region7: #{neural_net_forward.1} parent=0 // pred_check_branch
    %15 = sbr.rel (0) target = $region9
  $region8: #{neural_net_forward.1} parent=0 // pred_region
    _
  $region9: #{neural_net_forward.1} parent=0 // pred_fallthru
    _
  // Predicated region
  $region10: #{neural_net_forward.1} parent=0 // pred_check
    _
  $region11: #{neural_net_forward.1} parent=0 // pred_check_branch
    %17 = sbr.rel (0) target = $region13
  $region12: #{neural_net_forward.1} parent=0 // pred_region
    _
  $region13: #{neural_net_forward.1} parent=0 // pred_fallthru
    _
  // Predicated region
  $region14: #{neural_net_forward.1} parent=0 // pred_check
    _
  $region15: #{neural_net_forward.1} parent=0 // pred_check_branch
    %19 = sbr.rel (0) target = $region17
  $region16: #{neural_net_forward.1} parent=0 // pred_region
    _
  $region17: #{neural_net_forward.1} parent=0 // pred_fallthru
    _
  // Predicated region
  $region18: #{neural_net_forward.1} parent=0 // pred_check
    _
  $region19: #{neural_net_forward.1} parent=0 // pred_check_branch
    %21 = sbr.rel (0) target = $region21
  $region20: #{neural_net_forward.1} parent=0 // pred_region
    _
  $region21: #{neural_net_forward.1} parent=0 // pred_fallthru
    _
  // Predicated region
  $region22: #{neural_net_forward.1} parent=0 // pred_check
    _
  $region23: #{neural_net_forward.1} parent=0 // pred_check_branch
    %23 = sbr.rel (0) target = $region25
  $region24: #{neural_net_forward.1} parent=0 // pred_region
    _
  $region25: #{neural_net_forward.1} parent=0 // pred_fallthru
    _
  // Predicated region
  $region26: #{neural_net_forward.1} parent=0 // pred_check
    _
  $region27: #{neural_net_forward.1} parent=0 // pred_check_branch
    %25 = sbr.rel (0) target = $region29
  $region28: #{neural_net_forward.1} parent=0 // pred_region
    _
  $region29: #{neural_net_forward.1} parent=0 // pred_fallthru
    _
  %v27 = vld [vmem:[%s0] sm:$0xf]
  %v28 = vld [vmem:[%s0 + $0x4] sm:$0xf]
  %v29 = vld [vmem:[%s0 + $0x8] sm:$0xf]
  %v30 = vld [vmem:[%s0 + $0xc] sm:$0xf]
  %v31 = vld [vmem:[%s0 + $0x10] sm:$0xf]
  %v32 = vld [vmem:[%s0 + $0x14] sm:$0xf]
  %v33 = vld [vmem:[%s0 + $0x18] sm:$0xf]
  %v34 = vld [vmem:[%s0 + $0x1c] sm:$0xf]
  %v35 = vld [vmem:[%s1] sm:$0xf]
  %v36 = vld [vmem:[%s1 + $0x4] sm:$0xf]
  %v37 = vld [vmem:[%s1 + $0x8] sm:$0xf]
  %v38 = vld [vmem:[%s1 + $0xc] sm:$0xf]
  %v39 = vld [vmem:[%s1 + $0x10] sm:$0xf]
  %v40 = vld [vmem:[%s1 + $0x14] sm:$0xf]
  %v41 = vld [vmem:[%s1 + $0x18] sm:$0xf]
  %v42 = vld [vmem:[%s1 + $0x1c] sm:$0xf]
  %v43 = vld [vmem:[%s1 + $0x20] sm:$0xf]
  %v44 = vld [vmem:[%s1 + $0x24] sm:$0xf]
  %v45 = vld [vmem:[%s1 + $0x28] sm:$0xf]
  %v46 = vld [vmem:[%s1 + $0x2c] sm:$0xf]
  %v47 = vld [vmem:[%s1 + $0x30] sm:$0xf]
  %v48 = vld [vmem:[%s1 + $0x34] sm:$0xf]
  %v49 = vld [vmem:[%s1 + $0x38] sm:$0xf]
  %v50 = vld [vmem:[%s1 + $0x3c] sm:$0xf]
  %v51 = vld [vmem:[%s2] sm:$0x1]
  %v53 = vlaneseq
  %v54 = vshrl.u32 %v53, 7
  %v55 = vsub.s32 0, %v54
  %v56 = vrot.slane %v51, %v55
  %v66 = vunpack.c.l.b16 %v27
  %v67 = vunpack.c.l.b16 %v28
  %v68 = vunpack.c.l.b16 %v29
  %v69 = vunpack.c.l.b16 %v30
  %v70 = vunpack.c.l.b16 %v31
  %v71 = vunpack.c.l.b16 %v32
  %v72 = vunpack.c.l.b16 %v33
  %v73 = vunpack.c.l.b16 %v34
  %v74 = vpack.c.b16 %v67, %v66
  %v75 = vpack.c.b16 %v69, %v68
  %v76 = vpack.c.b16 %v71, %v70
  %v77 = vpack.c.b16 %v73, %v72
  %v98 = vunpack.c.l.b16 %v35
  %v99 = vunpack.c.l.b16 %v36
  %v100 = vunpack.c.l.b16 %v37
  %v101 = vunpack.c.l.b16 %v38
  %v102 = vunpack.c.l.b16 %v39
  %v103 = vunpack.c.l.b16 %v40
  %v104 = vunpack.c.l.b16 %v41
  %v105 = vunpack.c.l.b16 %v42
  %v106 = vunpack.c.l.b16 %v43
  %v107 = vunpack.c.l.b16 %v44
  %v108 = vunpack.c.l.b16 %v45
  %v109 = vunpack.c.l.b16 %v46
  %v110 = vunpack.c.l.b16 %v47
  %v111 = vunpack.c.l.b16 %v48
  %v112 = vunpack.c.l.b16 %v49
  %v113 = vunpack.c.l.b16 %v50
  %v114 = vpack.c.b16 %v99, %v98
  %v115 = vpack.c.b16 %v101, %v100
  %v116 = vpack.c.b16 %v103, %v102
  %v117 = vpack.c.b16 %v105, %v104
  %v118 = vpack.c.b16 %v107, %v106
  %v119 = vpack.c.b16 %v109, %v108
  %v120 = vpack.c.b16 %v111, %v110
  %v121 = vpack.c.b16 %v113, %v112
  %130 = vmatprep.subr.bf16.mxu0 0
  %131 = vmatpush1.bf16.msra.mxu0 %v121
  %132 = vmatprep.subr.bf16.mxu0 0
  %133 = vmatpush1.bf16.msra.mxu0 %v120
  %134 = vmatprep.subr.bf16.mxu0 0
  %135 = vmatpush1.bf16.msra.mxu0 %v119
  %136 = vmatprep.subr.bf16.mxu0 0
  %137 = vmatpush1.bf16.msra.mxu0 %v118
  %138 = vmatprep.subr.bf16.mxu0 0
  %139 = vmatpush1.bf16.msra.mxu0 %v117
  %140 = vmatprep.subr.bf16.mxu0 0
  %141 = vmatpush1.bf16.msra.mxu0 %v116
  %142 = vmatprep.subr.bf16.mxu0 0
  %143 = vmatpush1.bf16.msra.mxu0 %v115
  %144 = vmatprep.subr.bf16.mxu0 0
  %145 = vmatpush1.bf16.msra.mxu0 %v114
  %146 = vmatprep.subr.bf16.mxu0 0
  %147 = vmatpush2.bf16.msra.mxu0 0
  %148 = vmatprep.subr.bf16.mxu0 0
  %149 = vmatpush2.bf16.msra.mxu0 0
  %150 = vmatprep.subr.bf16.mxu0 0
  %151 = vmatpush2.bf16.msra.mxu0 0
  %152 = vmatprep.subr.bf16.mxu0 0
  %153 = vmatpush2.bf16.msra.mxu0 0
  %154 = vmatprep.subr.bf16.mxu0 0
  %155 = vmatpush2.bf16.msra.mxu0 0
  %156 = vmatprep.subr.bf16.mxu0 0
  %157 = vmatpush2.bf16.msra.mxu0 0
  %158 = vmatprep.subr.bf16.mxu0 0
  %159 = vmatpush2.bf16.msra.mxu0 0
  %160 = vmatprep.subr.bf16.mxu0 0
  %161 = vmatpush2.bf16.msra.mxu0 0
  %162 = vmatprep.mubr.bf16.mxu0 0
  %163 = vmatmul.mubr.bf16.gmra.mxu0 %v74
  %v164 = vpop.f32.mrf.mxu0
  %v165 = vadd.f32 %v56, %v164
  %v166 = vpop.f32.mrf.mxu0
  %v167 = vpop.f32.mrf.mxu0
  %v168 = vadd.f32 %v56, %v167
  %v169 = vpop.f32.mrf.mxu0
  %170 = vmatprep.mubr.bf16.mxu0 0
  %171 = vmatmul.mubr.bf16.gmra.mxu0 %v75
  %v172 = vpop.f32.mrf.mxu0
  %v173 = vadd.f32 %v56, %v172
  %v174 = vpop.f32.mrf.mxu0
  %v175 = vpop.f32.mrf.mxu0
  %v176 = vadd.f32 %v56, %v175
  %v177 = vpop.f32.mrf.mxu0
  %178 = vmatprep.mubr.bf16.mxu0 0
  %179 = vmatmul.mubr.bf16.gmra.mxu0 %v76
  %v180 = vpop.f32.mrf.mxu0
  %v181 = vadd.f32 %v56, %v180
  %v182 = vpop.f32.mrf.mxu0
  %v183 = vpop.f32.mrf.mxu0
  %v184 = vadd.f32 %v56, %v183
  %v185 = vpop.f32.mrf.mxu0
  %186 = vmatprep.mubr.bf16.mxu0 0
  %187 = vmatmul.mubr.bf16.gmra.mxu0 %v77
  %v188 = vpop.f32.mrf.mxu0
  %v189 = vadd.f32 %v56, %v188
  %v190 = vpop.f32.mrf.mxu0
  %v191 = vpop.f32.mrf.mxu0
  %v192 = vadd.f32 %v56, %v191
  %v193 = vpop.f32.mrf.mxu0
  %194 = vdwg.mxu0
  %v195 = vmax.f32 %v165, 0.0
  %v196 = vmax.f32 %v168, 0.0
  %v197 = vmax.f32 %v173, 0.0
  %v198 = vmax.f32 %v176, 0.0
  %v199 = vmax.f32 %v181, 0.0
  %v200 = vmax.f32 %v184, 0.0
  %v201 = vmax.f32 %v189, 0.0
  %v202 = vmax.f32 %v192, 0.0
  %v203 = vpack.c.bf16 %v196, %v195
  %v204 = vpack.c.bf16 %v198, %v197
  %v205 = vpack.c.bf16 %v200, %v199
  %v206 = vpack.c.bf16 %v202, %v201
  %p207 = scmp.eq.s32.totalorder 0, 0
  // Predicated region
  $region30: #{neural_net_forward.1} parent=0 // pred_check
    %p208 = pneg %p207
  $region31: #{neural_net_forward.1} parent=0 // pred_check_branch
    %210 = sbr.rel (%p208) target = $region33
  $region32: #{neural_net_forward.1} parent=0 // pred_region
    %211 = vst [vmem:[#allocation2] sm:$0xff] 0.0
    %212 = vst [vmem:[#allocation2 + $0x8] sm:$0xff] 0.0
    %213 = vst [vmem:[#allocation2 + $0x10] sm:$0xff] 0.0
    %214 = vst [vmem:[#allocation2 + $0x18] sm:$0xff] 0.0
    %215 = vst [vmem:[#allocation2 + $0x20] sm:$0xff] 0.0
    %216 = vst [vmem:[#allocation2 + $0x28] sm:$0xff] 0.0
    %217 = vst [vmem:[#allocation2 + $0x30] sm:$0xff] 0.0
    %218 = vst [vmem:[#allocation2 + $0x38] sm:$0xff] 0.0
  $region33: #{neural_net_forward.1} parent=0 // pred_fallthru
    _
  %v219 = vld [vmem:[#allocation2] sm:$0xff]
  %v220 = vld [vmem:[#allocation2 + $0x8] sm:$0xff]
  %v221 = vld [vmem:[#allocation2 + $0x10] sm:$0xff]
  %v222 = vld [vmem:[#allocation2 + $0x18] sm:$0xff]
  %v223 = vld [vmem:[#allocation2 + $0x20] sm:$0xff]
  %v224 = vld [vmem:[#allocation2 + $0x28] sm:$0xff]
  %v225 = vld [vmem:[#allocation2 + $0x30] sm:$0xff]
  %v226 = vld [vmem:[#allocation2 + $0x38] sm:$0xff]
  %v227 = vld [vmem:[%s3] sm:$0xf]
  %v228 = vld [vmem:[%s3 + $0x4] sm:$0xf]
  %v229 = vld [vmem:[%s3 + $0x8] sm:$0xf]
  %v230 = vld [vmem:[%s3 + $0xc] sm:$0xf]
  %v231 = vld [vmem:[%s3 + $0x10] sm:$0xf]
  %v232 = vld [vmem:[%s3 + $0x14] sm:$0xf]
  %v233 = vld [vmem:[%s3 + $0x18] sm:$0xf]
  %v234 = vld [vmem:[%s3 + $0x1c] sm:$0xf]
  %v235 = vld [vmem:[%s3 + $0x20] sm:$0xf]
  %v236 = vld [vmem:[%s3 + $0x24] sm:$0xf]
  %v237 = vld [vmem:[%s3 + $0x28] sm:$0xf]
  %v238 = vld [vmem:[%s3 + $0x2c] sm:$0xf]
  %v239 = vld [vmem:[%s3 + $0x30] sm:$0xf]
  %v240 = vld [vmem:[%s3 + $0x34] sm:$0xf]
  %v241 = vld [vmem:[%s3 + $0x38] sm:$0xf]
  %v242 = vld [vmem:[%s3 + $0x3c] sm:$0xf]
  %v259 = vunpack.c.l.b16 %v227
  %v260 = vunpack.c.l.b16 %v228
  %v261 = vunpack.c.l.b16 %v229
  %v262 = vunpack.c.l.b16 %v230
  %v263 = vunpack.c.l.b16 %v231
  %v264 = vunpack.c.l.b16 %v232
  %v265 = vunpack.c.l.b16 %v233
  %v266 = vunpack.c.l.b16 %v234
  %v267 = vunpack.c.l.b16 %v235
  %v268 = vunpack.c.l.b16 %v236
  %v269 = vunpack.c.l.b16 %v237
  %v270 = vunpack.c.l.b16 %v238
  %v271 = vunpack.c.l.b16 %v239
  %v272 = vunpack.c.l.b16 %v240
  %v273 = vunpack.c.l.b16 %v241
  %v274 = vunpack.c.l.b16 %v242
  %v275 = vpack.c.b16 %v260, %v259
  %v276 = vpack.c.b16 %v262, %v261
  %v277 = vpack.c.b16 %v264, %v263
  %v278 = vpack.c.b16 %v266, %v265
  %v279 = vpack.c.b16 %v268, %v267
  %v280 = vpack.c.b16 %v270, %v269
  %v281 = vpack.c.b16 %v272, %v271
  %v282 = vpack.c.b16 %v274, %v273
  %291 = vmatprep.subr.bf16.mxu0 0
  %292 = vmatpush1.bf16.msra.mxu0 %v282
  %293 = vmatprep.subr.bf16.mxu0 0
  %294 = vmatpush1.bf16.msra.mxu0 %v281
  %295 = vmatprep.subr.bf16.mxu0 0
  %296 = vmatpush1.bf16.msra.mxu0 %v280
  %297 = vmatprep.subr.bf16.mxu0 0
  %298 = vmatpush1.bf16.msra.mxu0 %v279
  %299 = vmatprep.subr.bf16.mxu0 0
  %300 = vmatpush1.bf16.msra.mxu0 %v278
  %301 = vmatprep.subr.bf16.mxu0 0
  %302 = vmatpush1.bf16.msra.mxu0 %v277
  %303 = vmatprep.subr.bf16.mxu0 0
  %304 = vmatpush1.bf16.msra.mxu0 %v276
  %305 = vmatprep.subr.bf16.mxu0 0
  %306 = vmatpush1.bf16.msra.mxu0 %v275
  %307 = vmatprep.subr.bf16.mxu0 0
  %308 = vmatpush2.bf16.msra.mxu0 0
  %309 = vmatprep.subr.bf16.mxu0 0
  %310 = vmatpush2.bf16.msra.mxu0 0
  %311 = vmatprep.subr.bf16.mxu0 0
  %312 = vmatpush2.bf16.msra.mxu0 0
  %313 = vmatprep.subr.bf16.mxu0 0
  %314 = vmatpush2.bf16.msra.mxu0 0
  %315 = vmatprep.subr.bf16.mxu0 0
  %316 = vmatpush2.bf16.msra.mxu0 0
  %317 = vmatprep.subr.bf16.mxu0 0
  %318 = vmatpush2.bf16.msra.mxu0 0
  %319 = vmatprep.subr.bf16.mxu0 0
  %320 = vmatpush2.bf16.msra.mxu0 0
  %321 = vmatprep.subr.bf16.mxu0 0
  %322 = vmatpush2.bf16.msra.mxu0 0
  %323 = vmatprep.mubr.bf16.mxu0 0
  %324 = vmatmul.mubr.bf16.gmra.mxu0 %v203
  %v325 = vpop.f32.mrf.mxu0
  %v326 = vadd.f32 0.0, %v325
  %v327 = vpop.f32.mrf.mxu0
  %v328 = vpop.f32.mrf.mxu0
  %v329 = vadd.f32 0.0, %v328
  %v330 = vpop.f32.mrf.mxu0
  %331 = vmatprep.mubr.bf16.mxu0 0
  %332 = vmatmul.mubr.bf16.gmra.mxu0 %v204
  %v333 = vpop.f32.mrf.mxu0
  %v334 = vadd.f32 0.0, %v333
  %v335 = vpop.f32.mrf.mxu0
  %v336 = vpop.f32.mrf.mxu0
  %v337 = vadd.f32 0.0, %v336
  %v338 = vpop.f32.mrf.mxu0
  %339 = vmatprep.mubr.bf16.mxu0 0
  %340 = vmatmul.mubr.bf16.gmra.mxu0 %v205
  %v341 = vpop.f32.mrf.mxu0
  %v342 = vadd.f32 0.0, %v341
  %v343 = vpop.f32.mrf.mxu0
  %v344 = vpop.f32.mrf.mxu0
  %v345 = vadd.f32 0.0, %v344
  %v346 = vpop.f32.mrf.mxu0
  %347 = vmatprep.mubr.bf16.mxu0 0
  %348 = vmatmul.mubr.bf16.gmra.mxu0 %v206
  %v349 = vpop.f32.mrf.mxu0
  %v350 = vadd.f32 0.0, %v349
  %v351 = vpop.f32.mrf.mxu0
  %v352 = vpop.f32.mrf.mxu0
  %v353 = vadd.f32 0.0, %v352
  %v354 = vpop.f32.mrf.mxu0
  %355 = vdwg.mxu0
  %v356 = vadd.f32 %v219, %v326
  %v357 = vadd.f32 %v220, %v329
  %v358 = vadd.f32 %v221, %v334
  %v359 = vadd.f32 %v222, %v337
  %v360 = vadd.f32 %v223, %v342
  %v361 = vadd.f32 %v224, %v345
  %v362 = vadd.f32 %v225, %v350
  %v363 = vadd.f32 %v226, %v353
  %364 = vst [vmem:[#allocation2] sm:$0xff] %v356
  %365 = vst [vmem:[#allocation2 + $0x8] sm:$0xff] %v357
  %366 = vst [vmem:[#allocation2 + $0x10] sm:$0xff] %v358
  %367 = vst [vmem:[#allocation2 + $0x18] sm:$0xff] %v359
  %368 = vst [vmem:[#allocation2 + $0x20] sm:$0xff] %v360
  %369 = vst [vmem:[#allocation2 + $0x28] sm:$0xff] %v361
  %370 = vst [vmem:[#allocation2 + $0x30] sm:$0xff] %v362
  %371 = vst [vmem:[#allocation2 + $0x38] sm:$0xff] %v363
  // Predicated region
  $region34: #{neural_net_forward.1} parent=0 // pred_check
    %p372 = pneg %p207
  $region35: #{neural_net_forward.1} parent=0 // pred_check_branch
    %374 = sbr.rel (%p372) target = $region37
  $region36: #{neural_net_forward.1} parent=0 // pred_region
    %v375 = vld [vmem:[#allocation2] sm:$0xff]
    %v376 = vld [vmem:[#allocation2 + $0x8] sm:$0xff]
    %v377 = vld [vmem:[#allocation2 + $0x10] sm:$0xff]
    %v378 = vld [vmem:[#allocation2 + $0x18] sm:$0xff]
    %v379 = vld [vmem:[#allocation2 + $0x20] sm:$0xff]
    %v380 = vld [vmem:[#allocation2 + $0x28] sm:$0xff]
    %v381 = vld [vmem:[#allocation2 + $0x30] sm:$0xff]
    %v382 = vld [vmem:[#allocation2 + $0x38] sm:$0xff]
    %v383 = vld [vmem:[%s4] sm:$0x1]
    %v385 = vlaneseq
    %v386 = vshrl.u32 %v385, 7
    %v387 = vsub.s32 0, %v386
    %v388 = vrot.slane %v383, %v387
    %v390 = vadd.f32 %v375, %v388
    %v391 = vadd.f32 %v376, %v388
    %v392 = vadd.f32 %v377, %v388
    %v393 = vadd.f32 %v378, %v388
    %v394 = vadd.f32 %v379, %v388
    %v395 = vadd.f32 %v380, %v388
    %v396 = vadd.f32 %v381, %v388
    %v397 = vadd.f32 %v382, %v388
    %v398 = vmax.f32 %v390, 0.0
    %v399 = vmax.f32 %v391, 0.0
    %v400 = vmax.f32 %v392, 0.0
    %v401 = vmax.f32 %v393, 0.0
    %v402 = vmax.f32 %v394, 0.0
    %v403 = vmax.f32 %v395, 0.0
    %v404 = vmax.f32 %v396, 0.0
    %v405 = vmax.f32 %v397, 0.0
    %v406 = vpack.c.bf16 %v399, %v398
    %v407 = vpack.c.bf16 %v401, %v400
    %v408 = vpack.c.bf16 %v403, %v402
    %v409 = vpack.c.bf16 %v405, %v404
    %v410 = vld [vmem:[%s5] sm:$0xf]
    %v411 = vld [vmem:[%s5 + $0x4] sm:$0xf]
    %v412 = vld [vmem:[%s5 + $0x8] sm:$0xf]
    %v413 = vld [vmem:[%s5 + $0xc] sm:$0xf]
    %v414 = vld [vmem:[%s5 + $0x10] sm:$0xf]
    %v415 = vld [vmem:[%s5 + $0x14] sm:$0xf]
    %v416 = vld [vmem:[%s5 + $0x18] sm:$0xf]
    %v417 = vld [vmem:[%s5 + $0x1c] sm:$0xf]
    %v418 = vld [vmem:[%s5 + $0x20] sm:$0xf]
    %v419 = vld [vmem:[%s5 + $0x24] sm:$0xf]
    %v420 = vld [vmem:[%s5 + $0x28] sm:$0xf]
    %v421 = vld [vmem:[%s5 + $0x2c] sm:$0xf]
    %v422 = vld [vmem:[%s5 + $0x30] sm:$0xf]
    %v423 = vld [vmem:[%s5 + $0x34] sm:$0xf]
    %v424 = vld [vmem:[%s5 + $0x38] sm:$0xf]
    %v425 = vld [vmem:[%s5 + $0x3c] sm:$0xf]
    %v426 = vld [vmem:[%s6] sm:$0x1]
    %v428 = vlaneseq
    %v429 = vshrl.u32 %v428, 7
    %v430 = vsub.s32 0, %v429
    %v431 = vrot.slane %v426, %v430
    %v449 = vunpack.c.l.b16 %v410
    %v450 = vunpack.c.l.b16 %v411
    %v451 = vunpack.c.l.b16 %v412
    %v452 = vunpack.c.l.b16 %v413
    %v453 = vunpack.c.l.b16 %v414
    %v454 = vunpack.c.l.b16 %v415
    %v455 = vunpack.c.l.b16 %v416
    %v456 = vunpack.c.l.b16 %v417
    %v457 = vunpack.c.l.b16 %v418
    %v458 = vunpack.c.l.b16 %v419
    %v459 = vunpack.c.l.b16 %v420
    %v460 = vunpack.c.l.b16 %v421
    %v461 = vunpack.c.l.b16 %v422
    %v462 = vunpack.c.l.b16 %v423
    %v463 = vunpack.c.l.b16 %v424
    %v464 = vunpack.c.l.b16 %v425
    %v465 = vpack.c.b16 %v450, %v449
    %v466 = vpack.c.b16 %v452, %v451
    %v467 = vpack.c.b16 %v454, %v453
    %v468 = vpack.c.b16 %v456, %v455
    %v469 = vpack.c.b16 %v458, %v457
    %v470 = vpack.c.b16 %v460, %v459
    %v471 = vpack.c.b16 %v462, %v461
    %v472 = vpack.c.b16 %v464, %v463
    %481 = vmatprep.subr.bf16.mxu0 0
    %482 = vmatpush1.bf16.msra.mxu0 %v472
    %483 = vmatprep.subr.bf16.mxu0 0
    %484 = vmatpush1.bf16.msra.mxu0 %v471
    %485 = vmatprep.subr.bf16.mxu0 0
    %486 = vmatpush1.bf16.msra.mxu0 %v470
    %487 = vmatprep.subr.bf16.mxu0 0
    %488 = vmatpush1.bf16.msra.mxu0 %v469
    %489 = vmatprep.subr.bf16.mxu0 0
    %490 = vmatpush1.bf16.msra.mxu0 %v468
    %491 = vmatprep.subr.bf16.mxu0 0
    %492 = vmatpush1.bf16.msra.mxu0 %v467
    %493 = vmatprep.subr.bf16.mxu0 0
    %494 = vmatpush1.bf16.msra.mxu0 %v466
    %495 = vmatprep.subr.bf16.mxu0 0
    %496 = vmatpush1.bf16.msra.mxu0 %v465
    %497 = vmatprep.subr.bf16.mxu0 0
    %498 = vmatpush2.bf16.msra.mxu0 0
    %499 = vmatprep.subr.bf16.mxu0 0
    %500 = vmatpush2.bf16.msra.mxu0 0
    %501 = vmatprep.subr.bf16.mxu0 0
    %502 = vmatpush2.bf16.msra.mxu0 0
    %503 = vmatprep.subr.bf16.mxu0 0
    %504 = vmatpush2.bf16.msra.mxu0 0
    %505 = vmatprep.subr.bf16.mxu0 0
    %506 = vmatpush2.bf16.msra.mxu0 0
    %507 = vmatprep.subr.bf16.mxu0 0
    %508 = vmatpush2.bf16.msra.mxu0 0
    %509 = vmatprep.subr.bf16.mxu0 0
    %510 = vmatpush2.bf16.msra.mxu0 0
    %511 = vmatprep.subr.bf16.mxu0 0
    %512 = vmatpush2.bf16.msra.mxu0 0
    %513 = vmatprep.mubr.bf16.mxu0 0
    %514 = vmatmul.mubr.bf16.gmra.mxu0 %v406
    %v515 = vpop.f32.mrf.mxu0
    %v516 = vadd.f32 %v431, %v515
    %v517 = vpop.f32.mrf.mxu0
    %v518 = vpop.f32.mrf.mxu0
    %v519 = vadd.f32 %v431, %v518
    %v520 = vpop.f32.mrf.mxu0
    %521 = vmatprep.mubr.bf16.mxu0 0
    %522 = vmatmul.mubr.bf16.gmra.mxu0 %v407
    %v523 = vpop.f32.mrf.mxu0
    %v524 = vadd.f32 %v431, %v523
    %v525 = vpop.f32.mrf.mxu0
    %v526 = vpop.f32.mrf.mxu0
    %v527 = vadd.f32 %v431, %v526
    %v528 = vpop.f32.mrf.mxu0
    %529 = vmatprep.mubr.bf16.mxu0 0
    %530 = vmatmul.mubr.bf16.gmra.mxu0 %v408
    %v531 = vpop.f32.mrf.mxu0
    %v532 = vadd.f32 %v431, %v531
    %v533 = vpop.f32.mrf.mxu0
    %v534 = vpop.f32.mrf.mxu0
    %v535 = vadd.f32 %v431, %v534
    %v536 = vpop.f32.mrf.mxu0
    %537 = vmatprep.mubr.bf16.mxu0 0
    %538 = vmatmul.mubr.bf16.gmra.mxu0 %v409
    %v539 = vpop.f32.mrf.mxu0
    %v540 = vadd.f32 %v431, %v539
    %v541 = vpop.f32.mrf.mxu0
    %v542 = vpop.f32.mrf.mxu0
    %v543 = vadd.f32 %v431, %v542
    %v544 = vpop.f32.mrf.mxu0
    %545 = vdwg.mxu0
    %546 = vst [vmem:[%s7] sm:$0xff] %v516
    %547 = vst [vmem:[%s7 + $0x8] sm:$0xff] %v519
    %548 = vst [vmem:[%s7 + $0x10] sm:$0xff] %v524
    %549 = vst [vmem:[%s7 + $0x18] sm:$0xff] %v527
    %550 = vst [vmem:[%s7 + $0x20] sm:$0xff] %v532
    %551 = vst [vmem:[%s7 + $0x28] sm:$0xff] %v535
    %552 = vst [vmem:[%s7 + $0x30] sm:$0xff] %v540
    %553 = vst [vmem:[%s7 + $0x38] sm:$0xff] %v543
  $region37: #{neural_net_forward.1} parent=0 // pred_fallthru
    _
  // Predicated region
  $region38: #{neural_net_forward.1} parent=0 // pred_check
    _
  $region39: #{neural_net_forward.1} parent=0 // pred_check_branch
    %555 = sbr.rel (0) target = $region41
  $region40: #{neural_net_forward.1} parent=0 // pred_region
    _
  $region41: #{neural_net_forward.1} parent=0 // pred_fallthru
    _
  // Predicated region
  $region42: #{neural_net_forward.1} parent=0 // pred_check
    _
  $region43: #{neural_net_forward.1} parent=0 // pred_check_branch
    %557 = sbr.rel (0) target = $region45
  $region44: #{neural_net_forward.1} parent=0 // pred_region
    _
  $region45: #{neural_net_forward.1} parent=0 // pred_fallthru
    _

</llo_original>
